<compile_context>
chip_gen: v7x
topology: tpu7x:2x2x1
jax: 0.10.0
libtpu: 0.0.40
codegen_flags: <defaults>
</compile_context>

<pallas_src>
import jax
import jax.numpy as jnp
from jax.experimental import pallas as pl
from jax.experimental.pallas import tpu as pltpu


def _round_up(x, m):
    return (x + m - 1) // m * m


def _cdiv(a, b):
    return -(-a // b)


# ----------------------------- kernel ----------------------------------------


def fused_mtl_kernel(x_ref, w1_ref, b1_ref, w2p_ref, b2p_ref, w2q_ref, b2q_ref,
                     w3p_ref, b3p_ref, w3q_ref, b3q_ref, phase_ref, pos_ref):
    cd = w1_ref.dtype                      # MXU operand dtype (bf16 or f32)
    H = w2p_ref.shape[0]

    # layer 1, both branches side by side: (TB, in) @ (in, 2H), f32 accumulate
    x = x_ref[...]
    h = jnp.dot(x, w1_ref[...], preferred_element_type=jnp.float32) + b1_ref[...]
    h = jnp.maximum(h, 0.0)

    # split branches; layer 2 as two H x H dots (no zero-padded block-diag slab)
    hp = h[:, :H].astype(cd)
    hq = h[:, H:].astype(cd)
    gp = jnp.dot(hp, w2p_ref[...], preferred_element_type=jnp.float32) + b2p_ref[...]
    gq = jnp.dot(hq, w2q_ref[...], preferred_element_type=jnp.float32) + b2q_ref[...]
    gp = jnp.maximum(gp, 0.0).astype(cd)
    gq = jnp.maximum(gq, 0.0).astype(cd)

    # layer 3 heads, written straight to the unpadded outputs
    yp = jnp.dot(gp, w3p_ref[...], preferred_element_type=jnp.float32) + b3p_ref[...]
    yq = jnp.dot(gq, w3q_ref[...], preferred_element_type=jnp.float32) + b3q_ref[...]
    phase_ref[...] = yp.astype(phase_ref.dtype)
    pos_ref[...] = yq.astype(pos_ref.dtype)


# ----------------------------- param prep (run ONCE, not per forward) ---------


def prepare_params(params, *, compute_dtype=jnp.bfloat16):
    """Fuse the two layer-1 weights and cast MXU operands. Call once at init."""
    cd = compute_dtype
    w1 = jnp.concatenate([params["w1p"], params["w1q"]], axis=1).astype(cd)
    b1 = jnp.concatenate([params["b1p"], params["b1q"]], axis=1).astype(jnp.float32)
    return (
        w1, b1,
        params["w2p"].astype(cd), params["b2p"].astype(jnp.float32),
        params["w2q"].astype(cd), params["b2q"].astype(jnp.float32),
        params["w3p"].astype(cd), params["b3p"].astype(jnp.float32),
        params["w3q"].astype(cd), params["b3q"].astype(jnp.float32),
    )


# ----------------------------- wrapper ----------------------------------------


def _choose_tiling(B, *, max_tb=512, min_blocks=2):
    """Batch tile size + block count.

    - >= min_blocks tiles whenever B >= 16 so v7x's two TensorCores both get
      work and input/output DMA can overlap compute on all gens.
    - tile is a sublane multiple (8) and <= max_tb so activations stay tiny.
    - padding is bounded by ~8*num_blocks rows (no B_pad ~2x blow-up).
    """
    if B < 2 * 8:
        return _round_up(max(B, 1), 8), 1
    nb = max(min_blocks, _cdiv(B, max_tb))
    tb = _round_up(_cdiv(B, nb), 8)
    nb = _cdiv(B, tb)
    return tb, nb


def _fused_forward_xla(x, fused):
    """Plain-XLA fallback for tiny batches (same fused math, no kernel launch)."""
    w1, b1, w2p, b2p, w2q, b2q, w3p, b3p, w3q, b3q = fused
    cd = w1.dtype
    H = w2p.shape[0]
    h = jnp.maximum(jnp.dot(x.astype(cd), w1, preferred_element_type=jnp.float32) + b1, 0.0)
    gp = jnp.maximum(jnp.dot(h[:, :H].astype(cd), w2p, preferred_element_type=jnp.float32) + b2p, 0.0)
    gq = jnp.maximum(jnp.dot(h[:, H:].astype(cd), w2q, preferred_element_type=jnp.float32) + b2q, 0.0)
    phase = jnp.dot(gp.astype(cd), w3p, preferred_element_type=jnp.float32) + b3p
    pos = jnp.dot(gq.astype(cd), w3q, preferred_element_type=jnp.float32) + b3q
    return phase, pos


def split_mtl_forward(x, fused, *, max_tb=512, min_blocks=2, min_pallas_rows=1024):
    """x: (B, input_dim) float32.  fused: tuple from prepare_params()."""
    w1, b1, w2p, b2p, w2q, b2q, w3p, b3p, w3q, b3q = fused
    B, input_dim = x.shape

    # Below ~1k rows the kernel is launch/DMA overhead-bound; XLA's fused HLO
    # matches or beats it, so gate on batch size (demo forces the kernel with
    # min_pallas_rows=0).
    if B < min_pallas_rows:
        return _fused_forward_xla(x, fused)

    cd = w1.dtype
    itm = jnp.dtype(cd).itemsize
    H = w2p.shape[0]
    H2 = w1.shape[1]
    num_phase = w3p.shape[1]
    num_pos = w3q.shape[1]

    TB, num_blocks = _choose_tiling(B, max_tb=max_tb, min_blocks=min_blocks)
    B_pad = TB * num_blocks

    xc = x.astype(cd)
    if B_pad != B:
        # Padding is bounded to a handful of rows by _choose_tiling.
        xc = jnp.pad(xc, ((0, B_pad - B), (0, 0)))

    weight_bytes = (w1.size + w2p.size + w2q.size + w3p.size + w3q.size) * itm
    bias_bytes = (b1.size + b2p.size + b2q.size + b3p.size + b3q.size) * 4
    flops = 2 * B_pad * (input_dim * H2 + 2 * H * H + H * (num_phase + num_pos))
    bytes_accessed = (B_pad * input_dim * itm + weight_bytes + bias_bytes
                      + B_pad * (num_phase + num_pos) * 4)
    cost = pl.CostEstimate(flops=flops, transcendentals=0,
                           bytes_accessed=bytes_accessed)

    # Weights/biases: whole-array, single VMEM-resident copy (no 2-deep
    # double-buffer for constant-index operands). Only x / outputs pipeline.
    resident = pl.BlockSpec(memory_space=pltpu.MemorySpace.VMEM)

    compiler_kwargs = dict(dimension_semantics=("parallel",))
    # v7x: 64 MiB physical / 32 MiB default scoped VMEM. Raise the limit only
    # when this config actually needs it (double-buffered x/out + resident
    # weights + activation temps).
    vmem_bytes = (2 * TB * input_dim * itm
                  + 2 * TB * (num_phase + num_pos) * 4
                  + weight_bytes + bias_bytes
                  + TB * H2 * (4 + itm) + 2 * TB * H * (4 + itm))
    if vmem_bytes > 32 * 1024 * 1024:
        compiler_kwargs["vmem_limit_bytes"] = min(2 * vmem_bytes, 128 * 1024 * 1024)

    phase, pos = pl.pallas_call(
        fused_mtl_kernel,
        out_shape=(jax.ShapeDtypeStruct((B_pad, num_phase), jnp.float32),
                   jax.ShapeDtypeStruct((B_pad, num_pos), jnp.float32)),
        grid=(num_blocks,),
        in_specs=[pl.BlockSpec((TB, input_dim), lambda i: (i, 0))] + [resident] * 10,
        out_specs=(pl.BlockSpec((TB, num_phase), lambda i: (i, 0)),
                   pl.BlockSpec((TB, num_pos), lambda i: (i, 0))),
        compiler_params=pltpu.CompilerParams(**compiler_kwargs),
        cost_estimate=cost,
    )(xc, w1, b1, w2p, b2p, w2q, b2q, w3p, b3p, w3q, b3q)

    if B_pad != B:
        phase = phase[:B]
        pos = pos[:B]
    return phase, pos


# ----------------------------- params / reference -----------------------------


def init_params(key, input_dim, hidden_dim, num_phase_classes, num_pos_classes):
    """PyTorch-style uniform(+/- 1/sqrt(fan_in)) init.

    Weights stored as (in_features, out_features) (transpose of nn.Linear.weight)
    so the kernel computes x @ W directly.
    """
    def linear(key, fan_in, fan_out):
        kw, kb = jax.random.split(key)
        bound = 1.0 / jnp.sqrt(jnp.array(fan_in, dtype=jnp.float32))
        w = jax.random.uniform(kw, (fan_in, fan_out), jnp.float32, -bound, bound)
        b = jax.random.uniform(kb, (1, fan_out), jnp.float32, -bound, bound)
        return w, b

    keys = jax.random.split(key, 6)
    w1p, b1p = linear(keys[0], input_dim, hidden_dim)
    w2p, b2p = linear(keys[1], hidden_dim, hidden_dim)
    w3p, b3p = linear(keys[2], hidden_dim, num_phase_classes)
    w1q, b1q = linear(keys[3], input_dim, hidden_dim)
    w2q, b2q = linear(keys[4], hidden_dim, hidden_dim)
    w3q, b3q = linear(keys[5], hidden_dim, num_pos_classes)
    return dict(
        w1p=w1p, b1p=b1p, w2p=w2p, b2p=b2p, w3p=w3p, b3p=b3p,
        w1q=w1q, b1q=b1q, w2q=w2q, b2q=b2q, w3q=w3q, b3q=b3q,
    )


def reference_forward(x, p):
    """Pure-JAX f32 reference mirroring the PyTorch module (unfused)."""
    h = jnp.maximum(x @ p["w1p"] + p["b1p"], 0.0)
    h = jnp.maximum(h @ p["w2p"] + p["b2p"], 0.0)
    phase = h @ p["w3p"] + p["b3p"]
    g = jnp.maximum(x @ p["w1q"] + p["b1q"], 0.0)
    g = jnp.maximum(g @ p["w2q"] + p["b2q"], 0.0)
    pos = g @ p["w3q"] + p["b3q"]
    return phase, pos


if __name__ == "__main__":
    # Small shapes, but batch=64 so the batch grid has >= 2 tiles
    # (exercises megacore sharding / pipelining instead of collapsing to 1 block).
    batch = 64
    input_dim = 32
    hidden_dim = 32
    num_phase_classes = 8
    num_pos_classes = 4

    key = jax.random.PRNGKey(0)
    kx, kp = jax.random.split(key)
    x = jax.random.normal(kx, (batch, input_dim), jnp.float32)
    params = init_params(kp, input_dim, hidden_dim, num_phase_classes,
                         num_pos_classes)

    phase_ref, pos_ref = reference_forward(x, params)

    # --- f32 compute path: exact match against the unfused reference --------
    fused_f32 = prepare_params(params, compute_dtype=jnp.float32)
    phase_f32, pos_f32 = split_mtl_forward(x, fused_f32, min_pallas_rows=0)
    jax.block_until_ready((phase_f32, pos_f32))
    assert phase_f32.shape == (batch, num_phase_classes)
    assert pos_f32.shape == (batch, num_pos_classes)
    assert jnp.allclose(phase_f32, phase_ref, atol=1e-5, rtol=1e-5)
    assert jnp.allclose(pos_f32, pos_ref, atol=1e-5, rtol=1e-5)

    # --- bf16 compute path (v6e/v7x MXU fast path), f32 accumulation --------
    fused_bf16 = prepare_params(params, compute_dtype=jnp.bfloat16)
    phase_bf, pos_bf = split_mtl_forward(x, fused_bf16, min_pallas_rows=0)
    jax.block_until_ready((phase_bf, pos_bf))
    assert phase_bf.shape == (batch, num_phase_classes)
    assert pos_bf.shape == (batch, num_pos_classes)
    assert jnp.allclose(phase_bf, phase_ref, atol=5e-2, rtol=5e-2)
    assert jnp.allclose(pos_bf, pos_ref, atol=5e-2, rtol=5e-2)

    print("KERNEL_OK")
</pallas_src>

<mosaic_0001>
module attributes {stable_mosaic.version = 11 : i64} {
  func.func @fused_mtl_kernel(%arg0: i32, %arg1: memref<32x32xf32, #tpu.memory_space<vmem>>, %arg2: memref<32x64xf32, #tpu.memory_space<vmem>>, %arg3: memref<1x64xf32, #tpu.memory_space<vmem>>, %arg4: memref<32x32xf32, #tpu.memory_space<vmem>>, %arg5: memref<1x32xf32, #tpu.memory_space<vmem>>, %arg6: memref<32x32xf32, #tpu.memory_space<vmem>>, %arg7: memref<1x32xf32, #tpu.memory_space<vmem>>, %arg8: memref<32x8xf32, #tpu.memory_space<vmem>>, %arg9: memref<1x8xf32, #tpu.memory_space<vmem>>, %arg10: memref<32x4xf32, #tpu.memory_space<vmem>>, %arg11: memref<1x4xf32, #tpu.memory_space<vmem>>, %arg12: memref<32x8xf32, #tpu.memory_space<vmem>>, %arg13: memref<32x4xf32, #tpu.memory_space<vmem>>) attributes {dimension_semantics = [#tpu.dimension_semantics<parallel>], iteration_bounds = array<i64: 2>, scalar_prefetch = 0 : i64, scratch_operands = 0 : i64, tpu.core_type = #tpu.core_type<tc>, window_params = [{transform_indices = @transform_0, window_bounds = array<i64: 32, 32>}, {pipeline_mode = #tpu.pipeline_mode<synchronous>, transform_indices = @transform_1, window_bounds = array<i64: 32, 64>}, {pipeline_mode = #tpu.pipeline_mode<synchronous>, transform_indices = @transform_2, window_bounds = array<i64: 1, 64>}, {pipeline_mode = #tpu.pipeline_mode<synchronous>, transform_indices = @transform_3, window_bounds = array<i64: 32, 32>}, {pipeline_mode = #tpu.pipeline_mode<synchronous>, transform_indices = @transform_4, window_bounds = array<i64: 1, 32>}, {pipeline_mode = #tpu.pipeline_mode<synchronous>, transform_indices = @transform_5, window_bounds = array<i64: 32, 32>}, {pipeline_mode = #tpu.pipeline_mode<synchronous>, transform_indices = @transform_6, window_bounds = array<i64: 1, 32>}, {pipeline_mode = #tpu.pipeline_mode<synchronous>, transform_indices = @transform_7, window_bounds = array<i64: 32, 8>}, {pipeline_mode = #tpu.pipeline_mode<synchronous>, transform_indices = @transform_8, window_bounds = array<i64: 1, 8>}, {pipeline_mode = #tpu.pipeline_mode<synchronous>, transform_indices = @transform_9, window_bounds = array<i64: 32, 4>}, {pipeline_mode = #tpu.pipeline_mode<synchronous>, transform_indices = @transform_10, window_bounds = array<i64: 1, 4>}, {transform_indices = @transform_11, window_bounds = array<i64: 32, 8>}, {transform_indices = @transform_12, window_bounds = array<i64: 32, 4>}]} {
    %c0 = arith.constant 0 : index
    %c0_0 = arith.constant 0 : index
    %0 = vector.load %arg1[%c0, %c0_0] : memref<32x32xf32, #tpu.memory_space<vmem>>, vector<32x32xf32>
    %c0_1 = arith.constant 0 : index
    %c0_2 = arith.constant 0 : index
    %1 = vector.load %arg2[%c0_1, %c0_2] : memref<32x64xf32, #tpu.memory_space<vmem>>, vector<32x64xf32>
    %cst = arith.constant dense<0.000000e+00> : vector<32x64xf32>
    %2 = tpu.matmul %0, %1, %cst {dimension_numbers = #tpu.dot_dimension_numbers<[1], [0], [0], [1], [0, 0, 1, 1], [], []>} : vector<32x32xf32>, vector<32x64xf32>, vector<32x64xf32> -> vector<32x64xf32>
    %c0_3 = arith.constant 0 : index
    %c0_4 = arith.constant 0 : index
    %3 = vector.load %arg3[%c0_3, %c0_4] : memref<1x64xf32, #tpu.memory_space<vmem>>, vector<1x64xf32>
    %4 = vector.broadcast %3 : vector<1x64xf32> to vector<32x64xf32>
    %5 = arith.addf %2, %4 : vector<32x64xf32>
    %cst_5 = arith.constant 0.000000e+00 : f32
    %6 = vector.broadcast %cst_5 : f32 to vector<32x64xf32>
    %7 = arith.maximumf %5, %6 : vector<32x64xf32>
    %8 = vector.extract_strided_slice %7 {offsets = [0, 0], sizes = [32, 32], strides = [1, 1]} : vector<32x64xf32> to vector<32x32xf32>
    %9 = vector.extract_strided_slice %7 {offsets = [0, 32], sizes = [32, 32], strides = [1, 1]} : vector<32x64xf32> to vector<32x32xf32>
    %c0_6 = arith.constant 0 : index
    %c0_7 = arith.constant 0 : index
    %10 = vector.load %arg4[%c0_6, %c0_7] : memref<32x32xf32, #tpu.memory_space<vmem>>, vector<32x32xf32>
    %cst_8 = arith.constant dense<0.000000e+00> : vector<32x32xf32>
    %11 = tpu.matmul %8, %10, %cst_8 {dimension_numbers = #tpu.dot_dimension_numbers<[1], [0], [0], [1], [0, 0, 1, 1], [], []>} : vector<32x32xf32>, vector<32x32xf32>, vector<32x32xf32> -> vector<32x32xf32>
    %c0_9 = arith.constant 0 : index
    %c0_10 = arith.constant 0 : index
    %12 = vector.load %arg5[%c0_9, %c0_10] : memref<1x32xf32, #tpu.memory_space<vmem>>, vector<1x32xf32>
    %13 = vector.broadcast %12 : vector<1x32xf32> to vector<32x32xf32>
    %14 = arith.addf %11, %13 : vector<32x32xf32>
    %c0_11 = arith.constant 0 : index
    %c0_12 = arith.constant 0 : index
    %15 = vector.load %arg6[%c0_11, %c0_12] : memref<32x32xf32, #tpu.memory_space<vmem>>, vector<32x32xf32>
    %cst_13 = arith.constant dense<0.000000e+00> : vector<32x32xf32>
    %16 = tpu.matmul %9, %15, %cst_13 {dimension_numbers = #tpu.dot_dimension_numbers<[1], [0], [0], [1], [0, 0, 1, 1], [], []>} : vector<32x32xf32>, vector<32x32xf32>, vector<32x32xf32> -> vector<32x32xf32>
    %c0_14 = arith.constant 0 : index
    %c0_15 = arith.constant 0 : index
    %17 = vector.load %arg7[%c0_14, %c0_15] : memref<1x32xf32, #tpu.memory_space<vmem>>, vector<1x32xf32>
    %18 = vector.broadcast %17 : vector<1x32xf32> to vector<32x32xf32>
    %19 = arith.addf %16, %18 : vector<32x32xf32>
    %cst_16 = arith.constant 0.000000e+00 : f32
    %20 = vector.broadcast %cst_16 : f32 to vector<32x32xf32>
    %21 = arith.maximumf %14, %20 : vector<32x32xf32>
    %cst_17 = arith.constant 0.000000e+00 : f32
    %22 = vector.broadcast %cst_17 : f32 to vector<32x32xf32>
    %23 = arith.maximumf %19, %22 : vector<32x32xf32>
    %c0_18 = arith.constant 0 : index
    %c0_19 = arith.constant 0 : index
    %24 = vector.load %arg8[%c0_18, %c0_19] : memref<32x8xf32, #tpu.memory_space<vmem>>, vector<32x8xf32>
    %cst_20 = arith.constant dense<0.000000e+00> : vector<32x8xf32>
    %25 = tpu.matmul %21, %24, %cst_20 {dimension_numbers = #tpu.dot_dimension_numbers<[1], [0], [0], [1], [0, 0, 1, 1], [], []>} : vector<32x32xf32>, vector<32x8xf32>, vector<32x8xf32> -> vector<32x8xf32>
    %c0_21 = arith.constant 0 : index
    %c0_22 = arith.constant 0 : index
    %26 = vector.load %arg9[%c0_21, %c0_22] : memref<1x8xf32, #tpu.memory_space<vmem>>, vector<1x8xf32>
    %27 = vector.broadcast %26 : vector<1x8xf32> to vector<32x8xf32>
    %28 = arith.addf %25, %27 : vector<32x8xf32>
    %c0_23 = arith.constant 0 : index
    %c0_24 = arith.constant 0 : index
    %29 = vector.load %arg10[%c0_23, %c0_24] : memref<32x4xf32, #tpu.memory_space<vmem>>, vector<32x4xf32>
    %cst_25 = arith.constant dense<0.000000e+00> : vector<32x4xf32>
    %30 = tpu.matmul %23, %29, %cst_25 {dimension_numbers = #tpu.dot_dimension_numbers<[1], [0], [0], [1], [0, 0, 1, 1], [], []>} : vector<32x32xf32>, vector<32x4xf32>, vector<32x4xf32> -> vector<32x4xf32>
    %c0_26 = arith.constant 0 : index
    %c0_27 = arith.constant 0 : index
    %31 = vector.load %arg11[%c0_26, %c0_27] : memref<1x4xf32, #tpu.memory_space<vmem>>, vector<1x4xf32>
    %32 = vector.broadcast %31 : vector<1x4xf32> to vector<32x4xf32>
    %33 = arith.addf %30, %32 : vector<32x4xf32>
    %c0_28 = arith.constant 0 : index
    %c0_29 = arith.constant 0 : index
    %34 = vector.load %arg12[%c0_28, %c0_29] : memref<32x8xf32, #tpu.memory_space<vmem>>, vector<32x8xf32>
    tpu.vector_store %arg12[%c0_28, %c0_29], %28 {strides = array<i32>} : memref<32x8xf32, #tpu.memory_space<vmem>>, vector<32x8xf32>,
    %c0_30 = arith.constant 0 : index
    %c0_31 = arith.constant 0 : index
    %35 = vector.load %arg13[%c0_30, %c0_31] : memref<32x4xf32, #tpu.memory_space<vmem>>, vector<32x4xf32>
    tpu.vector_store %arg13[%c0_30, %c0_31], %33 {strides = array<i32>} : memref<32x4xf32, #tpu.memory_space<vmem>>, vector<32x4xf32>,
    return
  }
  func.func @transform_0(%arg0: i32) -> (i32, i32) {
    %c0_i32 = arith.constant 0 : i32
    %c0_i32_0 = arith.constant 0 : i32
    return %arg0, %c0_i32 : i32, i32
  }
  func.func @transform_1(%arg0: i32) -> (i32, i32) {
    %c0_i32 = arith.constant 0 : i32
    %c0_i32_0 = arith.constant 0 : i32
    %c0_i32_1 = arith.constant 0 : i32
    return %c0_i32, %c0_i32_0 : i32, i32
  }
  func.func @transform_2(%arg0: i32) -> (i32, i32) {
    %c0_i32 = arith.constant 0 : i32
    %c0_i32_0 = arith.constant 0 : i32
    %c0_i32_1 = arith.constant 0 : i32
    return %c0_i32, %c0_i32_0 : i32, i32
  }
  func.func @transform_3(%arg0: i32) -> (i32, i32) {
    %c0_i32 = arith.constant 0 : i32
    %c0_i32_0 = arith.constant 0 : i32
    %c0_i32_1 = arith.constant 0 : i32
    return %c0_i32, %c0_i32_0 : i32, i32
  }
  func.func @transform_4(%arg0: i32) -> (i32, i32) {
    %c0_i32 = arith.constant 0 : i32
    %c0_i32_0 = arith.constant 0 : i32
    %c0_i32_1 = arith.constant 0 : i32
    return %c0_i32, %c0_i32_0 : i32, i32
  }
  func.func @transform_5(%arg0: i32) -> (i32, i32) {
    %c0_i32 = arith.constant 0 : i32
    %c0_i32_0 = arith.constant 0 : i32
    %c0_i32_1 = arith.constant 0 : i32
    return %c0_i32, %c0_i32_0 : i32, i32
  }
  func.func @transform_6(%arg0: i32) -> (i32, i32) {
    %c0_i32 = arith.constant 0 : i32
    %c0_i32_0 = arith.constant 0 : i32
    %c0_i32_1 = arith.constant 0 : i32
    return %c0_i32, %c0_i32_0 : i32, i32
  }
  func.func @transform_7(%arg0: i32) -> (i32, i32) {
    %c0_i32 = arith.constant 0 : i32
    %c0_i32_0 = arith.constant 0 : i32
    %c0_i32_1 = arith.constant 0 : i32
    return %c0_i32, %c0_i32_0 : i32, i32
  }
  func.func @transform_8(%arg0: i32) -> (i32, i32) {
    %c0_i32 = arith.constant 0 : i32
    %c0_i32_0 = arith.constant 0 : i32
    %c0_i32_1 = arith.constant 0 : i32
    return %c0_i32, %c0_i32_0 : i32, i32
  }
  func.func @transform_9(%arg0: i32) -> (i32, i32) {
    %c0_i32 = arith.constant 0 : i32
    %c0_i32_0 = arith.constant 0 : i32
    %c0_i32_1 = arith.constant 0 : i32
    return %c0_i32, %c0_i32_0 : i32, i32
  }
  func.func @transform_10(%arg0: i32) -> (i32, i32) {
    %c0_i32 = arith.constant 0 : i32
    %c0_i32_0 = arith.constant 0 : i32
    %c0_i32_1 = arith.constant 0 : i32
    return %c0_i32, %c0_i32_0 : i32, i32
  }
  func.func @transform_11(%arg0: i32) -> (i32, i32) {
    %c0_i32 = arith.constant 0 : i32
    %c0_i32_0 = arith.constant 0 : i32
    return %arg0, %c0_i32 : i32, i32
  }
  func.func @transform_12(%arg0: i32) -> (i32, i32) {
    %c0_i32 = arith.constant 0 : i32
    %c0_i32_0 = arith.constant 0 : i32
    return %arg0, %c0_i32 : i32, i32
  }
}

</mosaic_0001>

<llo_original>
// kernel: tpu_custom_call.1
$region0: #{tpu_custom_call.1}
  #allocation0 [shape = 'u32[]', space=smem, size = 0x4, offset = 0x4, fixed_abs, tag = 'smem constant byte address 0x4 - core index']
  #allocation1 [shape = 'u32[144,128]{1,0:T(1,128)}', space=vmem, size = 0x12000, scoped, tag = 'internal scratch']
  %s0 = inlined_call_operand.vmem [shape: f32[64,32], index: 0, kind: input, shape index: {}]
  %s1 = inlined_call_operand.vmem [shape: f32[32,64], index: 1, kind: input, shape index: {}]
  %s2 = inlined_call_operand.vmem [shape: f32[1,64], index: 2, kind: input, shape index: {}]
  %s3 = inlined_call_operand.vmem [shape: f32[32,32], index: 3, kind: input, shape index: {}]
  %s4 = inlined_call_operand.vmem [shape: f32[1,32], index: 4, kind: input, shape index: {}]
  %s5 = inlined_call_operand.vmem [shape: f32[32,32], index: 5, kind: input, shape index: {}]
  %s6 = inlined_call_operand.vmem [shape: f32[1,32], index: 6, kind: input, shape index: {}]
  %s7 = inlined_call_operand.vmem [shape: f32[32,8], index: 7, kind: input, shape index: {}]
  %s8 = inlined_call_operand.vmem [shape: f32[1,8], index: 8, kind: input, shape index: {}]
  %s9 = inlined_call_operand.vmem [shape: f32[32,4], index: 9, kind: input, shape index: {}]
  %s10 = inlined_call_operand.vmem [shape: f32[1,4], index: 10, kind: input, shape index: {}]
  %s11 = inlined_call_operand.vmem [shape: f32[64,8], index: 11, kind: output, shape index: {0}]
  %s12 = inlined_call_operand.vmem [shape: f32[64,4], index: 12, kind: output, shape index: {1}]
  %13 = xla_tuple %s11, %s12
  %s14 = sld [smem:[#allocation0]]
  $region85: #{tpu_custom_call.1} parent=0
    _
  %s16 = ssub.s32 1, %s14
  %s17 = scalar_select 0, %s16, %s14
  loop: start=0, step=1, limit=4
  $region2: #{tpu_custom_call.1} parent=0 // loop_pre_header
    _
  $region3: #{tpu_custom_call.1} parent=0 // loop_header
    %s19 = sphi 0, %s23
    %p20 = scmp.ge.s32.totalorder %s19, 4
    %s29 = sphi 0, %s31
    %s32 = sphi 0, %s29
    %s33 = sphi 0, %s32
    %s49 = sphi 0, %s33
    %s53 = sphi 0, %s53
    %s55 = sphi 0, %s53
    %s56 = sphi 0, %s55
    %s70 = sphi 0, %s56
    %s74 = sphi 0, %s74
    %s76 = sphi 0, %s74
    %s77 = sphi 0, %s76
    %s91 = sphi 0, %s77
    %s95 = sphi 0, %s95
    %s97 = sphi 0, %s95
    %s98 = sphi 0, %s97
    %s112 = sphi 0, %s98
    %s116 = sphi 0, %s116
    %s118 = sphi 0, %s116
    %s119 = sphi 0, %s118
    %s133 = sphi 0, %s119
    %s137 = sphi 0, %s137
    %s139 = sphi 0, %s137
    %s140 = sphi 0, %s139
    %s154 = sphi 0, %s140
    %s158 = sphi 0, %s158
    %s160 = sphi 0, %s158
    %s161 = sphi 0, %s160
    %s175 = sphi 0, %s161
    %s179 = sphi 0, %s179
    %s181 = sphi 0, %s179
    %s182 = sphi 0, %s181
    %s196 = sphi 0, %s182
    %s200 = sphi 0, %s200
    %s202 = sphi 0, %s200
    %s203 = sphi 0, %s202
    %s217 = sphi 0, %s203
    %s221 = sphi 0, %s221
    %s223 = sphi 0, %s221
    %s224 = sphi 0, %s223
    %s238 = sphi 0, %s224
    %s242 = sphi 0, %s242
    %s244 = sphi 0, %s242
    %s245 = sphi 0, %s244
    %s259 = sphi 0, %s245
    %s265 = sphi 0, %s267
    %s268 = sphi 0, %s265
    %s269 = sphi 0, %s268
    %s285 = sphi 0, %s269
    %s291 = sphi 0, %s293
    %s294 = sphi 0, %s291
    %s295 = sphi 0, %s294
    %s311 = sphi 0, %s295
  $region4: #{tpu_custom_call.1} parent=0 // loop_header_branch
    %22 = sbr.rel (%p20) target = $region8
  $region5: #{tpu_custom_call.1} parent=0 // loop_body
    %s24 = ssub.s32 %s19, 1
    %s25 = ssub.s32 %s19, 2
    %s26 = sadd.s32 %s19, 1
    %s27 = ssub.s32 %s19, %s26
    %p28 = scmp.eq.s32.totalorder %s27, 0
    %s30 = sadd.s32 %s29, 1
    %s31 = scalar_select %p28, %s29, %s30
    %p34 = pneg %p28
    %p35 = scmp.eq.s32.totalorder %s19, 1
    %p36 = por %p34, %p35
    %p37 = scmp.ne.s32.totalorder %s29, %s32
    %p38 = scmp.eq.s32.totalorder %s19, 0
    %p39 = por %p37, %p38
    %p40 = scmp.ne.s32.totalorder %s29, %s32
    %p41 = scmp.eq.s32.totalorder %s24, 1
    %p42 = por %p40, %p41
    %p43 = scmp.ne.s32.totalorder %s32, %s33
    %p44 = scmp.eq.s32.totalorder %s24, 0
    %p45 = por %p43, %p44
    %p46 = scmp.ne.s32.totalorder %s32, %s33
    %p47 = scmp.eq.s32.totalorder %s25, 1
    %p48 = por %p46, %p47
    %p50 = scmp.ne.s32.totalorder %s33, %s49
    %p51 = scmp.eq.s32.totalorder %s25, 0
    %p52 = por %p50, %p51
    %s54 = sadd.s32 %s53, 1
    %p57 = scmp.eq.s32.totalorder %s19, 1
    %p58 = scmp.ne.s32.totalorder %s53, %s55
    %p59 = scmp.eq.s32.totalorder %s19, 0
    %p60 = por %p58, %p59
    %p61 = scmp.ne.s32.totalorder %s53, %s55
    %p62 = scmp.eq.s32.totalorder %s24, 1
    %p63 = por %p61, %p62
    %p64 = scmp.ne.s32.totalorder %s55, %s56
    %p65 = scmp.eq.s32.totalorder %s24, 0
    %p66 = por %p64, %p65
    %p67 = scmp.ne.s32.totalorder %s55, %s56
    %p68 = scmp.eq.s32.totalorder %s25, 1
    %p69 = por %p67, %p68
    %p71 = scmp.ne.s32.totalorder %s56, %s70
    %p72 = scmp.eq.s32.totalorder %s25, 0
    %p73 = por %p71, %p72
    %s75 = sadd.s32 %s74, 1
    %p78 = scmp.eq.s32.totalorder %s19, 1
    %p79 = scmp.ne.s32.totalorder %s74, %s76
    %p80 = scmp.eq.s32.totalorder %s19, 0
    %p81 = por %p79, %p80
    %p82 = scmp.ne.s32.totalorder %s74, %s76
    %p83 = scmp.eq.s32.totalorder %s24, 1
    %p84 = por %p82, %p83
    %p85 = scmp.ne.s32.totalorder %s76, %s77
    %p86 = scmp.eq.s32.totalorder %s24, 0
    %p87 = por %p85, %p86
    %p88 = scmp.ne.s32.totalorder %s76, %s77
    %p89 = scmp.eq.s32.totalorder %s25, 1
    %p90 = por %p88, %p89
    %p92 = scmp.ne.s32.totalorder %s77, %s91
    %p93 = scmp.eq.s32.totalorder %s25, 0
    %p94 = por %p92, %p93
    %s96 = sadd.s32 %s95, 1
    %p99 = scmp.eq.s32.totalorder %s19, 1
    %p100 = scmp.ne.s32.totalorder %s95, %s97
    %p101 = scmp.eq.s32.totalorder %s19, 0
    %p102 = por %p100, %p101
    %p103 = scmp.ne.s32.totalorder %s95, %s97
    %p104 = scmp.eq.s32.totalorder %s24, 1
    %p105 = por %p103, %p104
    %p106 = scmp.ne.s32.totalorder %s97, %s98
    %p107 = scmp.eq.s32.totalorder %s24, 0
    %p108 = por %p106, %p107
    %p109 = scmp.ne.s32.totalorder %s97, %s98
    %p110 = scmp.eq.s32.totalorder %s25, 1
    %p111 = por %p109, %p110
    %p113 = scmp.ne.s32.totalorder %s98, %s112
    %p114 = scmp.eq.s32.totalorder %s25, 0
    %p115 = por %p113, %p114
    %s117 = sadd.s32 %s116, 1
    %p120 = scmp.eq.s32.totalorder %s19, 1
    %p121 = scmp.ne.s32.totalorder %s116, %s118
    %p122 = scmp.eq.s32.totalorder %s19, 0
    %p123 = por %p121, %p122
    %p124 = scmp.ne.s32.totalorder %s116, %s118
    %p125 = scmp.eq.s32.totalorder %s24, 1
    %p126 = por %p124, %p125
    %p127 = scmp.ne.s32.totalorder %s118, %s119
    %p128 = scmp.eq.s32.totalorder %s24, 0
    %p129 = por %p127, %p128
    %p130 = scmp.ne.s32.totalorder %s118, %s119
    %p131 = scmp.eq.s32.totalorder %s25, 1
    %p132 = por %p130, %p131
    %p134 = scmp.ne.s32.totalorder %s119, %s133
    %p135 = scmp.eq.s32.totalorder %s25, 0
    %p136 = por %p134, %p135
    %s138 = sadd.s32 %s137, 1
    %p141 = scmp.eq.s32.totalorder %s19, 1
    %p142 = scmp.ne.s32.totalorder %s137, %s139
    %p143 = scmp.eq.s32.totalorder %s19, 0
    %p144 = por %p142, %p143
    %p145 = scmp.ne.s32.totalorder %s137, %s139
    %p146 = scmp.eq.s32.totalorder %s24, 1
    %p147 = por %p145, %p146
    %p148 = scmp.ne.s32.totalorder %s139, %s140
    %p149 = scmp.eq.s32.totalorder %s24, 0
    %p150 = por %p148, %p149
    %p151 = scmp.ne.s32.totalorder %s139, %s140
    %p152 = scmp.eq.s32.totalorder %s25, 1
    %p153 = por %p151, %p152
    %p155 = scmp.ne.s32.totalorder %s140, %s154
    %p156 = scmp.eq.s32.totalorder %s25, 0
    %p157 = por %p155, %p156
    %s159 = sadd.s32 %s158, 1
    %p162 = scmp.eq.s32.totalorder %s19, 1
    %p163 = scmp.ne.s32.totalorder %s158, %s160
    %p164 = scmp.eq.s32.totalorder %s19, 0
    %p165 = por %p163, %p164
    %p166 = scmp.ne.s32.totalorder %s158, %s160
    %p167 = scmp.eq.s32.totalorder %s24, 1
    %p168 = por %p166, %p167
    %p169 = scmp.ne.s32.totalorder %s160, %s161
    %p170 = scmp.eq.s32.totalorder %s24, 0
    %p171 = por %p169, %p170
    %p172 = scmp.ne.s32.totalorder %s160, %s161
    %p173 = scmp.eq.s32.totalorder %s25, 1
    %p174 = por %p172, %p173
    %p176 = scmp.ne.s32.totalorder %s161, %s175
    %p177 = scmp.eq.s32.totalorder %s25, 0
    %p178 = por %p176, %p177
    %s180 = sadd.s32 %s179, 1
    %p183 = scmp.eq.s32.totalorder %s19, 1
    %p184 = scmp.ne.s32.totalorder %s179, %s181
    %p185 = scmp.eq.s32.totalorder %s19, 0
    %p186 = por %p184, %p185
    %p187 = scmp.ne.s32.totalorder %s179, %s181
    %p188 = scmp.eq.s32.totalorder %s24, 1
    %p189 = por %p187, %p188
    %p190 = scmp.ne.s32.totalorder %s181, %s182
    %p191 = scmp.eq.s32.totalorder %s24, 0
    %p192 = por %p190, %p191
    %p193 = scmp.ne.s32.totalorder %s181, %s182
    %p194 = scmp.eq.s32.totalorder %s25, 1
    %p195 = por %p193, %p194
    %p197 = scmp.ne.s32.totalorder %s182, %s196
    %p198 = scmp.eq.s32.totalorder %s25, 0
    %p199 = por %p197, %p198
    %s201 = sadd.s32 %s200, 1
    %p204 = scmp.eq.s32.totalorder %s19, 1
    %p205 = scmp.ne.s32.totalorder %s200, %s202
    %p206 = scmp.eq.s32.totalorder %s19, 0
    %p207 = por %p205, %p206
    %p208 = scmp.ne.s32.totalorder %s200, %s202
    %p209 = scmp.eq.s32.totalorder %s24, 1
    %p210 = por %p208, %p209
    %p211 = scmp.ne.s32.totalorder %s202, %s203
    %p212 = scmp.eq.s32.totalorder %s24, 0
    %p213 = por %p211, %p212
    %p214 = scmp.ne.s32.totalorder %s202, %s203
    %p215 = scmp.eq.s32.totalorder %s25, 1
    %p216 = por %p214, %p215
    %p218 = scmp.ne.s32.totalorder %s203, %s217
    %p219 = scmp.eq.s32.totalorder %s25, 0
    %p220 = por %p218, %p219
    %s222 = sadd.s32 %s221, 1
    %p225 = scmp.eq.s32.totalorder %s19, 1
    %p226 = scmp.ne.s32.totalorder %s221, %s223
    %p227 = scmp.eq.s32.totalorder %s19, 0
    %p228 = por %p226, %p227
    %p229 = scmp.ne.s32.totalorder %s221, %s223
    %p230 = scmp.eq.s32.totalorder %s24, 1
    %p231 = por %p229, %p230
    %p232 = scmp.ne.s32.totalorder %s223, %s224
    %p233 = scmp.eq.s32.totalorder %s24, 0
    %p234 = por %p232, %p233
    %p235 = scmp.ne.s32.totalorder %s223, %s224
    %p236 = scmp.eq.s32.totalorder %s25, 1
    %p237 = por %p235, %p236
    %p239 = scmp.ne.s32.totalorder %s224, %s238
    %p240 = scmp.eq.s32.totalorder %s25, 0
    %p241 = por %p239, %p240
    %s243 = sadd.s32 %s242, 1
    %p246 = scmp.eq.s32.totalorder %s19, 1
    %p247 = scmp.ne.s32.totalorder %s242, %s244
    %p248 = scmp.eq.s32.totalorder %s19, 0
    %p249 = por %p247, %p248
    %p250 = scmp.ne.s32.totalorder %s242, %s244
    %p251 = scmp.eq.s32.totalorder %s24, 1
    %p252 = por %p250, %p251
    %p253 = scmp.ne.s32.totalorder %s244, %s245
    %p254 = scmp.eq.s32.totalorder %s24, 0
    %p255 = por %p253, %p254
    %p256 = scmp.ne.s32.totalorder %s244, %s245
    %p257 = scmp.eq.s32.totalorder %s25, 1
    %p258 = por %p256, %p257
    %p260 = scmp.ne.s32.totalorder %s245, %s259
    %p261 = scmp.eq.s32.totalorder %s25, 0
    %p262 = por %p260, %p261
    %s263 = ssub.s32 %s19, %s26
    %p264 = scmp.eq.s32.totalorder %s263, 0
    %s266 = sadd.s32 %s265, 1
    %s267 = scalar_select %p264, %s265, %s266
    %p270 = pneg %p264
    %p271 = scmp.eq.s32.totalorder %s19, 1
    %p272 = por %p270, %p271
    %p273 = scmp.ne.s32.totalorder %s265, %s268
    %p274 = scmp.eq.s32.totalorder %s19, 0
    %p275 = por %p273, %p274
    %p276 = scmp.ne.s32.totalorder %s265, %s268
    %p277 = scmp.eq.s32.totalorder %s24, 1
    %p278 = por %p276, %p277
    %p279 = scmp.ne.s32.totalorder %s268, %s269
    %p280 = scmp.eq.s32.totalorder %s24, 0
    %p281 = por %p279, %p280
    %p282 = scmp.ne.s32.totalorder %s268, %s269
    %p283 = scmp.eq.s32.totalorder %s25, 1
    %p284 = por %p282, %p283
    %p286 = scmp.ne.s32.totalorder %s269, %s285
    %p287 = scmp.eq.s32.totalorder %s25, 0
    %p288 = por %p286, %p287
    %s289 = ssub.s32 %s19, %s26
    %p290 = scmp.eq.s32.totalorder %s289, 0
    %s292 = sadd.s32 %s291, 1
    %s293 = scalar_select %p290, %s291, %s292
    %p296 = pneg %p290
    %p297 = scmp.eq.s32.totalorder %s19, 1
    %p298 = por %p296, %p297
    %p299 = scmp.ne.s32.totalorder %s291, %s294
    %p300 = scmp.eq.s32.totalorder %s19, 0
    %p301 = por %p299, %p300
    %p302 = scmp.ne.s32.totalorder %s291, %s294
    %p303 = scmp.eq.s32.totalorder %s24, 1
    %p304 = por %p302, %p303
    %p305 = scmp.ne.s32.totalorder %s294, %s295
    %p306 = scmp.eq.s32.totalorder %s24, 0
    %p307 = por %p305, %p306
    %p308 = scmp.ne.s32.totalorder %s294, %s295
    %p309 = scmp.eq.s32.totalorder %s25, 1
    %p310 = por %p308, %p309
    %p312 = scmp.ne.s32.totalorder %s295, %s311
    %p313 = scmp.eq.s32.totalorder %s25, 0
    %p314 = por %p312, %p313
    %p315 = scmp.le.s32.totalorder 1, %s19
    %p316 = scmp.lt.s32.totalorder %s19, 3
    %p317 = pnand %p315, %p316
    %p318 = pneg %p317
    // Predicated region
    $region9: #{tpu_custom_call.1} parent=5 // pred_check
      _
    $region10: #{tpu_custom_call.1} parent=5 // pred_check_branch
      %320 = sbr.rel (%p317) target = $region12
    $region11: #{tpu_custom_call.1} parent=5 // pred_region
      %s321 = ssub.s32 %s19, 1
      // Predicated region
      $region13: #{tpu_custom_call.1} parent=11 // pred_check
        %p322 = pneg %p66
      $region14: #{tpu_custom_call.1} parent=11 // pred_check_branch
        %324 = sbr.rel (%p322) target = $region16
      $region15: #{tpu_custom_call.1} parent=11 // pred_region
        _
      $region16: #{tpu_custom_call.1} parent=11 // pred_fallthru
        _
      // Predicated region
      $region17: #{tpu_custom_call.1} parent=11 // pred_check
        %p325 = pneg %p87
      $region18: #{tpu_custom_call.1} parent=11 // pred_check_branch
        %327 = sbr.rel (%p325) target = $region20
      $region19: #{tpu_custom_call.1} parent=11 // pred_region
        _
      $region20: #{tpu_custom_call.1} parent=11 // pred_fallthru
        _
      // Predicated region
      $region21: #{tpu_custom_call.1} parent=11 // pred_check
        %p328 = pneg %p108
      $region22: #{tpu_custom_call.1} parent=11 // pred_check_branch
        %330 = sbr.rel (%p328) target = $region24
      $region23: #{tpu_custom_call.1} parent=11 // pred_region
        _
      $region24: #{tpu_custom_call.1} parent=11 // pred_fallthru
        _
      // Predicated region
      $region25: #{tpu_custom_call.1} parent=11 // pred_check
        %p331 = pneg %p129
      $region26: #{tpu_custom_call.1} parent=11 // pred_check_branch
        %333 = sbr.rel (%p331) target = $region28
      $region27: #{tpu_custom_call.1} parent=11 // pred_region
        _
      $region28: #{tpu_custom_call.1} parent=11 // pred_fallthru
        _
      // Predicated region
      $region29: #{tpu_custom_call.1} parent=11 // pred_check
        %p334 = pneg %p150
      $region30: #{tpu_custom_call.1} parent=11 // pred_check_branch
        %336 = sbr.rel (%p334) target = $region32
      $region31: #{tpu_custom_call.1} parent=11 // pred_region
        _
      $region32: #{tpu_custom_call.1} parent=11 // pred_fallthru
        _
      // Predicated region
      $region33: #{tpu_custom_call.1} parent=11 // pred_check
        %p337 = pneg %p171
      $region34: #{tpu_custom_call.1} parent=11 // pred_check_branch
        %339 = sbr.rel (%p337) target = $region36
      $region35: #{tpu_custom_call.1} parent=11 // pred_region
        _
      $region36: #{tpu_custom_call.1} parent=11 // pred_fallthru
        _
      // Predicated region
      $region37: #{tpu_custom_call.1} parent=11 // pred_check
        %p340 = pneg %p192
      $region38: #{tpu_custom_call.1} parent=11 // pred_check_branch
        %342 = sbr.rel (%p340) target = $region40
      $region39: #{tpu_custom_call.1} parent=11 // pred_region
        _
      $region40: #{tpu_custom_call.1} parent=11 // pred_fallthru
        _
      // Predicated region
      $region41: #{tpu_custom_call.1} parent=11 // pred_check
        %p343 = pneg %p213
      $region42: #{tpu_custom_call.1} parent=11 // pred_check_branch
        %345 = sbr.rel (%p343) target = $region44
      $region43: #{tpu_custom_call.1} parent=11 // pred_region
        _
      $region44: #{tpu_custom_call.1} parent=11 // pred_fallthru
        _
      // Predicated region
      $region45: #{tpu_custom_call.1} parent=11 // pred_check
        %p346 = pneg %p234
      $region46: #{tpu_custom_call.1} parent=11 // pred_check_branch
        %348 = sbr.rel (%p346) target = $region48
      $region47: #{tpu_custom_call.1} parent=11 // pred_region
        _
      $region48: #{tpu_custom_call.1} parent=11 // pred_fallthru
        _
      // Predicated region
      $region49: #{tpu_custom_call.1} parent=11 // pred_check
        %p349 = pneg %p255
      $region50: #{tpu_custom_call.1} parent=11 // pred_check_branch
        %351 = sbr.rel (%p349) target = $region52
      $region51: #{tpu_custom_call.1} parent=11 // pred_region
        _
      $region52: #{tpu_custom_call.1} parent=11 // pred_fallthru
        _
    $region12: #{tpu_custom_call.1} parent=5 // pred_fallthru
      _
    %p352 = scmp.lt.s32.totalorder %s19, 2
    // Predicated region
    $region53: #{tpu_custom_call.1} parent=5 // pred_check
      %p353 = pneg %p352
    $region54: #{tpu_custom_call.1} parent=5 // pred_check_branch
      %355 = sbr.rel (%p353) target = $region56
    $region55: #{tpu_custom_call.1} parent=5 // pred_region
      // Predicated region
      $region57: #{tpu_custom_call.1} parent=55 // pred_check
        %p356 = pneg %p39
      $region58: #{tpu_custom_call.1} parent=55 // pred_check_branch
        %358 = sbr.rel (%p356) target = $region60
      $region59: #{tpu_custom_call.1} parent=55 // pred_region
        %s359 = smul.u32 4, %s19
        %p360 = scmp.lt.s32.totalorder %s359, 7
        %s361 = scalar_select %p360, %s359, 7
        %s362 = smul.addr %s361, 8
        %s363 = scalar_lea.vmem %s0, %s362
        %s364 = smul.u32 4, %s19
      $region60: #{tpu_custom_call.1} parent=55 // pred_fallthru
        _
    $region56: #{tpu_custom_call.1} parent=5 // pred_fallthru
      _
    %p365 = scmp.le.s32.totalorder 1, %s19
    %p366 = scmp.lt.s32.totalorder %s19, 3
    %p367 = pnand %p365, %p366
    %p368 = pneg %p367
    // Predicated region
    $region61: #{tpu_custom_call.1} parent=5 // pred_check
      _
    $region62: #{tpu_custom_call.1} parent=5 // pred_check_branch
      %370 = sbr.rel (%p367) target = $region64
    $region63: #{tpu_custom_call.1} parent=5 // pred_region
      %s371 = ssub.s32 %s19, 1
      %s372 = smul.u32 4, %s24
      %p373 = scmp.lt.s32.totalorder %s372, 7
      %s374 = scalar_select %p373, %s372, 7
      %s375 = smul.addr %s374, 8
      %s376 = scalar_lea.vmem %s0, %s375
      %p377 = pneg %p45
      %p378 = pneg %p42
      %p379 = pneg %p66
      %p380 = pneg %p63
      %p381 = pneg %p87
      %p382 = pneg %p84
      %p383 = pneg %p108
      %p384 = pneg %p105
      %p385 = pneg %p129
      %p386 = pneg %p126
      %p387 = pneg %p150
      %p388 = pneg %p147
      %p389 = pneg %p171
      %p390 = pneg %p168
      %p391 = pneg %p192
      %p392 = pneg %p189
      %p393 = pneg %p213
      %p394 = pneg %p210
      %p395 = pneg %p234
      %p396 = pneg %p231
      %p397 = pneg %p255
      %p398 = pneg %p252
      %p399 = pneg %p281
      %p400 = pneg %p278
      %s401 = smul.u32 4, %s24
      %p402 = scmp.lt.s32.totalorder %s401, 7
      %s403 = scalar_select %p402, %s401, 7
      %s404 = smul.addr %s403, 8
      %s405 = scalar_lea.vmem %s11, %s404
      %p406 = pneg %p307
      %p407 = pneg %p304
      %s408 = smul.u32 4, %s24
      %p409 = scmp.lt.s32.totalorder %s408, 7
      %s410 = scalar_select %p409, %s408, 7
      %s411 = smul.addr %s410, 8
      %s412 = scalar_lea.vmem %s12, %s411
      %s413 = smul.u32 4, %s24
      %p414 = scmp.lt.s32.totalorder %s413, 7
      %s415 = scalar_select %p414, %s413, 7
      %s416 = smul.addr %s415, 8
      %s417 = scalar_lea.vmem %s0, %s416
      %s418 = smul.u32 4, %s24
      %s419 = smul.u32 4, %s24
      %p420 = scmp.lt.s32.totalorder %s419, 7
      %s421 = scalar_select %p420, %s419, 7
      %s422 = smul.addr %s421, 8
      %s423 = scalar_lea.vmem %s11, %s422
      %s424 = smul.u32 4, %s24
      %s425 = smul.u32 4, %s24
      %p426 = scmp.lt.s32.totalorder %s425, 7
      %s427 = scalar_select %p426, %s425, 7
      %s428 = smul.addr %s427, 8
      %s429 = scalar_lea.vmem %s12, %s428
      %s430 = smul.u32 4, %s24
      %v431 = vld [vmem:[%s417] sm:$0xff]
      %v432 = vld [vmem:[%s417 + $0x8] sm:$0xff]
      %v433 = vld [vmem:[%s417 + $0x10] sm:$0xff]
      %v434 = vld [vmem:[%s417 + $0x18] sm:$0xff]
      %v435 = vld [vmem:[%s1] sm:$0xff]
      %v436 = vld [vmem:[%s1 + $0x8] sm:$0xff]
      %v437 = vld [vmem:[%s1 + $0x10] sm:$0xff]
      %v438 = vld [vmem:[%s1 + $0x18] sm:$0xff]
      %v439 = vld [vmem:[%s2] sm:$0x1]
      %v441 = vlaneseq
      %v442 = vshrl.u32 %v441, 7
      %v443 = vsub.s32 0, %v442
      %v444 = vrot.slane %v439, %v443
      %vm446 = vcmask 261120
      %v448 = vsel %vm446, %v431, 0
      %v451 = vsel %vm446, %v432, 0
      %v454 = vsel %vm446, %v433, 0
      %v457 = vsel %vm446, %v434, 0
      %459 = vmatprep.subr.mxu0 0.0
      %460 = vmatpush1.msra.mxu0 %v435
      %461 = vmatprep.subr.mxu0 0.0
      %462 = vmatpush1.msra.mxu0 %v436
      %463 = vmatprep.subr.mxu0 0.0
      %464 = vmatpush1.msra.mxu0 %v437
      %465 = vmatprep.subr.mxu0 0.0
      %466 = vmatpush1.msra.mxu0 %v438
      %467 = vmatprep.subr.mxu0 0.0
      %468 = vmatpush1.msra.mxu0 0.0
      %469 = vmatprep.subr.mxu0 0.0
      %470 = vmatpush1.msra.mxu0 0.0
      %471 = vmatprep.subr.mxu0 0.0
      %472 = vmatpush1.msra.mxu0 0.0
      %473 = vmatprep.subr.mxu0 0.0
      %474 = vmatpush1.msra.mxu0 0.0
      %475 = vmatprep.subr.mxu0 0.0
      %476 = vmatpush1.msra.mxu0 0.0
      %477 = vmatprep.subr.mxu0 0.0
      %478 = vmatpush1.msra.mxu0 0.0
      %479 = vmatprep.subr.mxu0 0.0
      %480 = vmatpush1.msra.mxu0 0.0
      %481 = vmatprep.subr.mxu0 0.0
      %482 = vmatpush1.msra.mxu0 0.0
      %483 = vmatprep.subr.mxu0 0.0
      %484 = vmatpush1.msra.mxu0 0.0
      %485 = vmatprep.subr.mxu0 0.0
      %486 = vmatpush1.msra.mxu0 0.0
      %487 = vmatprep.subr.mxu0 0.0
      %488 = vmatpush1.msra.mxu0 0.0
      %489 = vmatprep.subr.mxu0 0.0
      %490 = vmatpush1.msra.mxu0 0.0
      %491 = vmatprep.subr.mxu0 0.0
      %492 = vmatpush1.msra.mxu0 0.0
      %493 = vmatprep.subr.mxu0 0.0
      %494 = vmatpush1.msra.mxu0 0.0
      %495 = vmatprep.subr.mxu0 0.0
      %496 = vmatpush1.msra.mxu0 0.0
      %497 = vmatprep.subr.mxu0 0.0
      %498 = vmatpush1.msra.mxu0 0.0
      %499 = vmatprep.subr.mxu0 0.0
      %500 = vmatpush1.msra.mxu0 0.0
      %501 = vmatprep.subr.mxu0 0.0
      %502 = vmatpush1.msra.mxu0 0.0
      %503 = vmatprep.subr.mxu0 0.0
      %504 = vmatpush1.msra.mxu0 0.0
      %505 = vmatprep.subr.mxu0 0.0
      %506 = vmatpush1.msra.mxu0 0.0
      %507 = vmatprep.subr.mxu0 0.0
      %508 = vmatpush1.msra.mxu0 0.0
      %509 = vmatprep.subr.mxu0 0.0
      %510 = vmatpush1.msra.mxu0 0.0
      %511 = vmatprep.subr.mxu0 0.0
      %512 = vmatpush1.msra.mxu0 0.0
      %513 = vmatprep.subr.mxu0 0.0
      %514 = vmatpush1.msra.mxu0 0.0
      %515 = vmatprep.subr.mxu0 0.0
      %516 = vmatpush1.msra.mxu0 0.0
      %517 = vmatprep.subr.mxu0 0.0
      %518 = vmatpush1.msra.mxu0 0.0
      %519 = vmatprep.subr.mxu0 0.0
      %520 = vmatpush1.msra.mxu0 0.0
      %521 = vmatprep.subr.mxu0 0.0
      %522 = vmatpush1.msra.mxu0 0.0
      %523 = vmatprep.mubr.f32.mxu0 0.0
      %524 = vmatmul.mubr.f32.gmra.mrb[0].mxu0 %v448
      %v525 = vpop.f32.mrb[0].mxu0
      %v526 = vadd.f32 %v444, %v525
      %v527 = vpop.f32.mrb[0].mxu0
      %528 = vmatprep.mubr.f32.mxu0 0.0
      %529 = vmatmul.mubr.f32.gmra.mrb[0].mxu0 %v451
      %v530 = vpop.f32.mrb[0].mxu0
      %v531 = vadd.f32 %v444, %v530
      %v532 = vpop.f32.mrb[0].mxu0
      %533 = vmatprep.mubr.f32.mxu0 0.0
      %534 = vmatmul.mubr.f32.gmra.mrb[0].mxu0 %v454
      %v535 = vpop.f32.mrb[0].mxu0
      %v536 = vadd.f32 %v444, %v535
      %v537 = vpop.f32.mrb[0].mxu0
      %538 = vmatprep.mubr.f32.mxu0 0.0
      %539 = vmatmul.mubr.f32.gmra.mrb[0].mxu0 %v457
      %v540 = vpop.f32.mrb[0].mxu0
      %v541 = vadd.f32 %v444, %v540
      %v542 = vpop.f32.mrb[0].mxu0
      %543 = vdwg.mxu0
      %v544 = vmax.f32 %v526, 0.0
      %v545 = vmax.f32 %v531, 0.0
      %v546 = vmax.f32 %v536, 0.0
      %v547 = vmax.f32 %v541, 0.0
      %v548 = vld [vmem:[%s3] sm:$0xff]
      %v549 = vld [vmem:[%s3 + $0x8] sm:$0xff]
      %v550 = vld [vmem:[%s3 + $0x10] sm:$0xff]
      %v551 = vld [vmem:[%s3 + $0x18] sm:$0xff]
      %v552 = vld [vmem:[%s4] sm:$0x1]
      %v554 = vlaneseq
      %v555 = vshrl.u32 %v554, 7
      %v556 = vsub.s32 0, %v555
      %v557 = vrot.slane %v552, %v556
      %v560 = vsel %vm446, %v544, 0
      %v563 = vsel %vm446, %v545, 0
      %v566 = vsel %vm446, %v546, 0
      %v569 = vsel %vm446, %v547, 0
      %571 = vmatprep.subr.mxu0 0.0
      %572 = vmatpush1.msra.mxu0 %v548
      %573 = vmatprep.subr.mxu0 0.0
      %574 = vmatpush1.msra.mxu0 %v549
      %575 = vmatprep.subr.mxu0 0.0
      %576 = vmatpush1.msra.mxu0 %v550
      %577 = vmatprep.subr.mxu0 0.0
      %578 = vmatpush1.msra.mxu0 %v551
      %579 = vmatprep.subr.mxu0 0.0
      %580 = vmatpush1.msra.mxu0 0.0
      %581 = vmatprep.subr.mxu0 0.0
      %582 = vmatpush1.msra.mxu0 0.0
      %583 = vmatprep.subr.mxu0 0.0
      %584 = vmatpush1.msra.mxu0 0.0
      %585 = vmatprep.subr.mxu0 0.0
      %586 = vmatpush1.msra.mxu0 0.0
      %587 = vmatprep.subr.mxu0 0.0
      %588 = vmatpush1.msra.mxu0 0.0
      %589 = vmatprep.subr.mxu0 0.0
      %590 = vmatpush1.msra.mxu0 0.0
      %591 = vmatprep.subr.mxu0 0.0
      %592 = vmatpush1.msra.mxu0 0.0
      %593 = vmatprep.subr.mxu0 0.0
      %594 = vmatpush1.msra.mxu0 0.0
      %595 = vmatprep.subr.mxu0 0.0
      %596 = vmatpush1.msra.mxu0 0.0
      %597 = vmatprep.subr.mxu0 0.0
      %598 = vmatpush1.msra.mxu0 0.0
      %599 = vmatprep.subr.mxu0 0.0
      %600 = vmatpush1.msra.mxu0 0.0
      %601 = vmatprep.subr.mxu0 0.0
      %602 = vmatpush1.msra.mxu0 0.0
      %603 = vmatprep.subr.mxu0 0.0
      %604 = vmatpush1.msra.mxu0 0.0
      %605 = vmatprep.subr.mxu0 0.0
      %606 = vmatpush1.msra.mxu0 0.0
      %607 = vmatprep.subr.mxu0 0.0
      %608 = vmatpush1.msra.mxu0 0.0
      %609 = vmatprep.subr.mxu0 0.0
      %610 = vmatpush1.msra.mxu0 0.0
      %611 = vmatprep.subr.mxu0 0.0
      %612 = vmatpush1.msra.mxu0 0.0
      %613 = vmatprep.subr.mxu0 0.0
      %614 = vmatpush1.msra.mxu0 0.0
      %615 = vmatprep.subr.mxu0 0.0
      %616 = vmatpush1.msra.mxu0 0.0
      %617 = vmatprep.subr.mxu0 0.0
      %618 = vmatpush1.msra.mxu0 0.0
      %619 = vmatprep.subr.mxu0 0.0
      %620 = vmatpush1.msra.mxu0 0.0
      %621 = vmatprep.subr.mxu0 0.0
      %622 = vmatpush1.msra.mxu0 0.0
      %623 = vmatprep.subr.mxu0 0.0
      %624 = vmatpush1.msra.mxu0 0.0
      %625 = vmatprep.subr.mxu0 0.0
      %626 = vmatpush1.msra.mxu0 0.0
      %627 = vmatprep.subr.mxu0 0.0
      %628 = vmatpush1.msra.mxu0 0.0
      %629 = vmatprep.subr.mxu0 0.0
      %630 = vmatpush1.msra.mxu0 0.0
      %631 = vmatprep.subr.mxu0 0.0
      %632 = vmatpush1.msra.mxu0 0.0
      %633 = vmatprep.subr.mxu0 0.0
      %634 = vmatpush1.msra.mxu0 0.0
      %635 = vmatprep.mubr.f32.mxu0 0.0
      %636 = vmatmul.mubr.f32.gmra.mrb[0].mxu0 %v560
      %v637 = vpop.f32.mrb[0].mxu0
      %v638 = vadd.f32 %v557, %v637
      %v639 = vpop.f32.mrb[0].mxu0
      %640 = vmatprep.mubr.f32.mxu0 0.0
      %641 = vmatmul.mubr.f32.gmra.mrb[0].mxu0 %v563
      %v642 = vpop.f32.mrb[0].mxu0
      %v643 = vadd.f32 %v557, %v642
      %v644 = vpop.f32.mrb[0].mxu0
      %645 = vmatprep.mubr.f32.mxu0 0.0
      %646 = vmatmul.mubr.f32.gmra.mrb[0].mxu0 %v566
      %v647 = vpop.f32.mrb[0].mxu0
      %v648 = vadd.f32 %v557, %v647
      %v649 = vpop.f32.mrb[0].mxu0
      %650 = vmatprep.mubr.f32.mxu0 0.0
      %651 = vmatmul.mubr.f32.gmra.mrb[0].mxu0 %v569
      %v652 = vpop.f32.mrb[0].mxu0
      %v653 = vadd.f32 %v557, %v652
      %v654 = vpop.f32.mrb[0].mxu0
      %655 = vdwg.mxu0
      %v656 = vld [vmem:[%s5] sm:$0xff]
      %v657 = vld [vmem:[%s5 + $0x8] sm:$0xff]
      %v658 = vld [vmem:[%s5 + $0x10] sm:$0xff]
      %v659 = vld [vmem:[%s5 + $0x18] sm:$0xff]
      %v660 = vld [vmem:[%s6] sm:$0x1]
      %v662 = vlaneseq
      %v663 = vshrl.u32 %v662, 7
      %v664 = vsub.s32 0, %v663
      %v665 = vrot.slane %v660, %v664
      %667 = vrot.lane.b32.xlu0 %v544, 96
      %v668 = vpop.permute.xlu0 %667
      %669 = vrot.lane.b32.xlu0 %v545, 96
      %v670 = vpop.permute.xlu0 %669
      %671 = vrot.lane.b32.xlu0 %v546, 96
      %v672 = vpop.permute.xlu0 %671
      %673 = vrot.lane.b32.xlu0 %v547, 96
      %v674 = vpop.permute.xlu0 %673
      %v675 = vsel %vm446, %v668, 0
      %v677 = vsel %vm446, %v670, 0
      %v679 = vsel %vm446, %v672, 0
      %v681 = vsel %vm446, %v674, 0
      %683 = vmatprep.subr.mxu0 0.0
      %684 = vmatpush1.msra.mxu0 %v656
      %685 = vmatprep.subr.mxu0 0.0
      %686 = vmatpush1.msra.mxu0 %v657
      %687 = vmatprep.subr.mxu0 0.0
      %688 = vmatpush1.msra.mxu0 %v658
      %689 = vmatprep.subr.mxu0 0.0
      %690 = vmatpush1.msra.mxu0 %v659
      %691 = vmatprep.subr.mxu0 0.0
      %692 = vmatpush1.msra.mxu0 0.0
      %693 = vmatprep.subr.mxu0 0.0
      %694 = vmatpush1.msra.mxu0 0.0
      %695 = vmatprep.subr.mxu0 0.0
      %696 = vmatpush1.msra.mxu0 0.0
      %697 = vmatprep.subr.mxu0 0.0
      %698 = vmatpush1.msra.mxu0 0.0
      %699 = vmatprep.subr.mxu0 0.0
      %700 = vmatpush1.msra.mxu0 0.0
      %701 = vmatprep.subr.mxu0 0.0
      %702 = vmatpush1.msra.mxu0 0.0
      %703 = vmatprep.subr.mxu0 0.0
      %704 = vmatpush1.msra.mxu0 0.0
      %705 = vmatprep.subr.mxu0 0.0
      %706 = vmatpush1.msra.mxu0 0.0
      %707 = vmatprep.subr.mxu0 0.0
      %708 = vmatpush1.msra.mxu0 0.0
      %709 = vmatprep.subr.mxu0 0.0
      %710 = vmatpush1.msra.mxu0 0.0
      %711 = vmatprep.subr.mxu0 0.0
      %712 = vmatpush1.msra.mxu0 0.0
      %713 = vmatprep.subr.mxu0 0.0
      %714 = vmatpush1.msra.mxu0 0.0
      %715 = vmatprep.subr.mxu0 0.0
      %716 = vmatpush1.msra.mxu0 0.0
      %717 = vmatprep.subr.mxu0 0.0
      %718 = vmatpush1.msra.mxu0 0.0
      %719 = vmatprep.subr.mxu0 0.0
      %720 = vmatpush1.msra.mxu0 0.0
      %721 = vmatprep.subr.mxu0 0.0
      %722 = vmatpush1.msra.mxu0 0.0
      %723 = vmatprep.subr.mxu0 0.0
      %724 = vmatpush1.msra.mxu0 0.0
      %725 = vmatprep.subr.mxu0 0.0
      %726 = vmatpush1.msra.mxu0 0.0
      %727 = vmatprep.subr.mxu0 0.0
      %728 = vmatpush1.msra.mxu0 0.0
      %729 = vmatprep.subr.mxu0 0.0
      %730 = vmatpush1.msra.mxu0 0.0
      %731 = vmatprep.subr.mxu0 0.0
      %732 = vmatpush1.msra.mxu0 0.0
      %733 = vmatprep.subr.mxu0 0.0
      %734 = vmatpush1.msra.mxu0 0.0
      %735 = vmatprep.subr.mxu0 0.0
      %736 = vmatpush1.msra.mxu0 0.0
      %737 = vmatprep.subr.mxu0 0.0
      %738 = vmatpush1.msra.mxu0 0.0
      %739 = vmatprep.subr.mxu0 0.0
      %740 = vmatpush1.msra.mxu0 0.0
      %741 = vmatprep.subr.mxu0 0.0
      %742 = vmatpush1.msra.mxu0 0.0
      %743 = vmatprep.subr.mxu0 0.0
      %744 = vmatpush1.msra.mxu0 0.0
      %745 = vmatprep.subr.mxu0 0.0
      %746 = vmatpush1.msra.mxu0 0.0
      %747 = vmatprep.mubr.f32.mxu0 0.0
      %748 = vmatmul.mubr.f32.gmra.mrb[0].mxu0 %v675
      %v749 = vpop.f32.mrb[0].mxu0
      %v750 = vadd.f32 %v665, %v749
      %v751 = vpop.f32.mrb[0].mxu0
      %752 = vmatprep.mubr.f32.mxu0 0.0
      %753 = vmatmul.mubr.f32.gmra.mrb[0].mxu0 %v677
      %v754 = vpop.f32.mrb[0].mxu0
      %v755 = vadd.f32 %v665, %v754
      %v756 = vpop.f32.mrb[0].mxu0
      %757 = vmatprep.mubr.f32.mxu0 0.0
      %758 = vmatmul.mubr.f32.gmra.mrb[0].mxu0 %v679
      %v759 = vpop.f32.mrb[0].mxu0
      %v760 = vadd.f32 %v665, %v759
      %v761 = vpop.f32.mrb[0].mxu0
      %762 = vmatprep.mubr.f32.mxu0 0.0
      %763 = vmatmul.mubr.f32.gmra.mrb[0].mxu0 %v681
      %v764 = vpop.f32.mrb[0].mxu0
      %v765 = vadd.f32 %v665, %v764
      %v766 = vpop.f32.mrb[0].mxu0
      %767 = vdwg.mxu0
      %v768 = vmax.f32 %v638, 0.0
      %v769 = vmax.f32 %v643, 0.0
      %v770 = vmax.f32 %v648, 0.0
      %v771 = vmax.f32 %v653, 0.0
      %v772 = vmax.f32 %v750, 0.0
      %v773 = vmax.f32 %v755, 0.0
      %v774 = vmax.f32 %v760, 0.0
      %v775 = vmax.f32 %v765, 0.0
      %v776 = vld [vmem:[%s7] sm:$0xff]
      %v777 = vld [vmem:[%s7 + $0x8] sm:$0xff]
      %v778 = vld [vmem:[%s7 + $0x10] sm:$0xff]
      %v779 = vld [vmem:[%s7 + $0x18] sm:$0xff]
      %v780 = vld [vmem:[%s8] sm:$0x1]
      %v782 = vlaneseq
      %v783 = vshrl.u32 %v782, 7
      %v784 = vsub.s32 0, %v783
      %v785 = vrot.slane %v780, %v784
      %v788 = vsel %vm446, %v768, 0
      %v791 = vsel %vm446, %v769, 0
      %v794 = vsel %vm446, %v770, 0
      %v797 = vsel %vm446, %v771, 0
      %799 = vmatprep.subr.mxu0 0.0
      %800 = vmatpush1.msra.mxu0 %v776
      %801 = vmatprep.subr.mxu0 0.0
      %802 = vmatpush1.msra.mxu0 %v777
      %803 = vmatprep.subr.mxu0 0.0
      %804 = vmatpush1.msra.mxu0 %v778
      %805 = vmatprep.subr.mxu0 0.0
      %806 = vmatpush1.msra.mxu0 %v779
      %807 = vmatprep.subr.mxu0 0.0
      %808 = vmatpush1.msra.mxu0 0.0
      %809 = vmatprep.subr.mxu0 0.0
      %810 = vmatpush1.msra.mxu0 0.0
      %811 = vmatprep.subr.mxu0 0.0
      %812 = vmatpush1.msra.mxu0 0.0
      %813 = vmatprep.subr.mxu0 0.0
      %814 = vmatpush1.msra.mxu0 0.0
      %815 = vmatprep.subr.mxu0 0.0
      %816 = vmatpush1.msra.mxu0 0.0
      %817 = vmatprep.subr.mxu0 0.0
      %818 = vmatpush1.msra.mxu0 0.0
      %819 = vmatprep.subr.mxu0 0.0
      %820 = vmatpush1.msra.mxu0 0.0
      %821 = vmatprep.subr.mxu0 0.0
      %822 = vmatpush1.msra.mxu0 0.0
      %823 = vmatprep.subr.mxu0 0.0
      %824 = vmatpush1.msra.mxu0 0.0
      %825 = vmatprep.subr.mxu0 0.0
      %826 = vmatpush1.msra.mxu0 0.0
      %827 = vmatprep.subr.mxu0 0.0
      %828 = vmatpush1.msra.mxu0 0.0
      %829 = vmatprep.subr.mxu0 0.0
      %830 = vmatpush1.msra.mxu0 0.0
      %831 = vmatprep.subr.mxu0 0.0
      %832 = vmatpush1.msra.mxu0 0.0
      %833 = vmatprep.subr.mxu0 0.0
      %834 = vmatpush1.msra.mxu0 0.0
      %835 = vmatprep.subr.mxu0 0.0
      %836 = vmatpush1.msra.mxu0 0.0
      %837 = vmatprep.subr.mxu0 0.0
      %838 = vmatpush1.msra.mxu0 0.0
      %839 = vmatprep.subr.mxu0 0.0
      %840 = vmatpush1.msra.mxu0 0.0
      %841 = vmatprep.subr.mxu0 0.0
      %842 = vmatpush1.msra.mxu0 0.0
      %843 = vmatprep.subr.mxu0 0.0
      %844 = vmatpush1.msra.mxu0 0.0
      %845 = vmatprep.subr.mxu0 0.0
      %846 = vmatpush1.msra.mxu0 0.0
      %847 = vmatprep.subr.mxu0 0.0
      %848 = vmatpush1.msra.mxu0 0.0
      %849 = vmatprep.subr.mxu0 0.0
      %850 = vmatpush1.msra.mxu0 0.0
      %851 = vmatprep.subr.mxu0 0.0
      %852 = vmatpush1.msra.mxu0 0.0
      %853 = vmatprep.subr.mxu0 0.0
      %854 = vmatpush1.msra.mxu0 0.0
      %855 = vmatprep.subr.mxu0 0.0
      %856 = vmatpush1.msra.mxu0 0.0
      %857 = vmatprep.subr.mxu0 0.0
      %858 = vmatpush1.msra.mxu0 0.0
      %859 = vmatprep.subr.mxu0 0.0
      %860 = vmatpush1.msra.mxu0 0.0
      %861 = vmatprep.subr.mxu0 0.0
      %862 = vmatpush1.msra.mxu0 0.0
      %863 = vmatprep.mubr.f32.mxu0 0.0
      %864 = vmatmul.mubr.f32.gmra.mrb[0].mxu0 %v788
      %v865 = vpop.f32.mrb[0].mxu0
      %v866 = vadd.f32 %v785, %v865
      %v867 = vpop.f32.mrb[0].mxu0
      %868 = vmatprep.mubr.f32.mxu0 0.0
      %869 = vmatmul.mubr.f32.gmra.mrb[0].mxu0 %v791
      %v870 = vpop.f32.mrb[0].mxu0
      %v871 = vadd.f32 %v785, %v870
      %v872 = vpop.f32.mrb[0].mxu0
      %873 = vmatprep.mubr.f32.mxu0 0.0
      %874 = vmatmul.mubr.f32.gmra.mrb[0].mxu0 %v794
      %v875 = vpop.f32.mrb[0].mxu0
      %v876 = vadd.f32 %v785, %v875
      %v877 = vpop.f32.mrb[0].mxu0
      %878 = vmatprep.mubr.f32.mxu0 0.0
      %879 = vmatmul.mubr.f32.gmra.mrb[0].mxu0 %v797
      %v880 = vpop.f32.mrb[0].mxu0
      %v881 = vadd.f32 %v785, %v880
      %v882 = vpop.f32.mrb[0].mxu0
      %883 = vdwg.mxu0
      %v884 = vld [vmem:[%s9] sm:$0xff]
      %v885 = vld [vmem:[%s9 + $0x8] sm:$0xff]
      %v886 = vld [vmem:[%s9 + $0x10] sm:$0xff]
      %v887 = vld [vmem:[%s9 + $0x18] sm:$0xff]
      %v888 = vld [vmem:[%s10] sm:$0x1]
      %v890 = vlaneseq
      %v891 = vshrl.u32 %v890, 7
      %v892 = vsub.s32 0, %v891
      %v893 = vrot.slane %v888, %v892
      %v896 = vsel %vm446, %v772, 0
      %v899 = vsel %vm446, %v773, 0
      %v902 = vsel %vm446, %v774, 0
      %v905 = vsel %vm446, %v775, 0
      %907 = vmatprep.subr.mxu0 0.0
      %908 = vmatpush1.msra.mxu0 %v884
      %909 = vmatprep.subr.mxu0 0.0
      %910 = vmatpush1.msra.mxu0 %v885
      %911 = vmatprep.subr.mxu0 0.0
      %912 = vmatpush1.msra.mxu0 %v886
      %913 = vmatprep.subr.mxu0 0.0
      %914 = vmatpush1.msra.mxu0 %v887
      %915 = vmatprep.subr.mxu0 0.0
      %916 = vmatpush1.msra.mxu0 0.0
      %917 = vmatprep.subr.mxu0 0.0
      %918 = vmatpush1.msra.mxu0 0.0
      %919 = vmatprep.subr.mxu0 0.0
      %920 = vmatpush1.msra.mxu0 0.0
      %921 = vmatprep.subr.mxu0 0.0
      %922 = vmatpush1.msra.mxu0 0.0
      %923 = vmatprep.subr.mxu0 0.0
      %924 = vmatpush1.msra.mxu0 0.0
      %925 = vmatprep.subr.mxu0 0.0
      %926 = vmatpush1.msra.mxu0 0.0
      %927 = vmatprep.subr.mxu0 0.0
      %928 = vmatpush1.msra.mxu0 0.0
      %929 = vmatprep.subr.mxu0 0.0
      %930 = vmatpush1.msra.mxu0 0.0
      %931 = vmatprep.subr.mxu0 0.0
      %932 = vmatpush1.msra.mxu0 0.0
      %933 = vmatprep.subr.mxu0 0.0
      %934 = vmatpush1.msra.mxu0 0.0
      %935 = vmatprep.subr.mxu0 0.0
      %936 = vmatpush1.msra.mxu0 0.0
      %937 = vmatprep.subr.mxu0 0.0
      %938 = vmatpush1.msra.mxu0 0.0
      %939 = vmatprep.subr.mxu0 0.0
      %940 = vmatpush1.msra.mxu0 0.0
      %941 = vmatprep.subr.mxu0 0.0
      %942 = vmatpush1.msra.mxu0 0.0
      %943 = vmatprep.subr.mxu0 0.0
      %944 = vmatpush1.msra.mxu0 0.0
      %945 = vmatprep.subr.mxu0 0.0
      %946 = vmatpush1.msra.mxu0 0.0
      %947 = vmatprep.subr.mxu0 0.0
      %948 = vmatpush1.msra.mxu0 0.0
      %949 = vmatprep.subr.mxu0 0.0
      %950 = vmatpush1.msra.mxu0 0.0
      %951 = vmatprep.subr.mxu0 0.0
      %952 = vmatpush1.msra.mxu0 0.0
      %953 = vmatprep.subr.mxu0 0.0
      %954 = vmatpush1.msra.mxu0 0.0
      %955 = vmatprep.subr.mxu0 0.0
      %956 = vmatpush1.msra.mxu0 0.0
      %957 = vmatprep.subr.mxu0 0.0
      %958 = vmatpush1.msra.mxu0 0.0
      %959 = vmatprep.subr.mxu0 0.0
      %960 = vmatpush1.msra.mxu0 0.0
      %961 = vmatprep.subr.mxu0 0.0
      %962 = vmatpush1.msra.mxu0 0.0
      %963 = vmatprep.subr.mxu0 0.0
      %964 = vmatpush1.msra.mxu0 0.0
      %965 = vmatprep.subr.mxu0 0.0
      %966 = vmatpush1.msra.mxu0 0.0
      %967 = vmatprep.subr.mxu0 0.0
      %968 = vmatpush1.msra.mxu0 0.0
      %969 = vmatprep.subr.mxu0 0.0
      %970 = vmatpush1.msra.mxu0 0.0
      %971 = vmatprep.mubr.f32.mxu0 0.0
      %972 = vmatmul.mubr.f32.gmra.mrb[0].mxu0 %v896
      %v973 = vpop.f32.mrb[0].mxu0
      %v974 = vadd.f32 %v893, %v973
      %v975 = vpop.f32.mrb[0].mxu0
      %976 = vmatprep.mubr.f32.mxu0 0.0
      %977 = vmatmul.mubr.f32.gmra.mrb[0].mxu0 %v899
      %v978 = vpop.f32.mrb[0].mxu0
      %v979 = vadd.f32 %v893, %v978
      %v980 = vpop.f32.mrb[0].mxu0
      %981 = vmatprep.mubr.f32.mxu0 0.0
      %982 = vmatmul.mubr.f32.gmra.mrb[0].mxu0 %v902
      %v983 = vpop.f32.mrb[0].mxu0
      %v984 = vadd.f32 %v893, %v983
      %v985 = vpop.f32.mrb[0].mxu0
      %986 = vmatprep.mubr.f32.mxu0 0.0
      %987 = vmatmul.mubr.f32.gmra.mrb[0].mxu0 %v905
      %v988 = vpop.f32.mrb[0].mxu0
      %v989 = vadd.f32 %v893, %v988
      %v990 = vpop.f32.mrb[0].mxu0
      %991 = vdwg.mxu0
      %vm992 = vcmask 64512
      %993 = vst.msk [vmem:[%s423] sm:$0xff] %vm992, %v866
      %994 = vst.msk [vmem:[%s423 + $0x8] sm:$0xff] %vm992, %v871
      %995 = vst.msk [vmem:[%s423 + $0x10] sm:$0xff] %vm992, %v876
      %996 = vst.msk [vmem:[%s423 + $0x18] sm:$0xff] %vm992, %v881
      %vm997 = vcmask 31744
      %998 = vst.msk [vmem:[%s429] sm:$0xff] %vm997, %v974
      %999 = vst.msk [vmem:[%s429 + $0x8] sm:$0xff] %vm997, %v979
      %1000 = vst.msk [vmem:[%s429 + $0x10] sm:$0xff] %vm997, %v984
      %1001 = vst.msk [vmem:[%s429 + $0x18] sm:$0xff] %vm997, %v989
      %s1002 = smul.u32 4, %s24
      %p1003 = scmp.lt.s32.totalorder %s1002, 7
      %s1004 = scalar_select %p1003, %s1002, 7
      %s1005 = smul.addr %s1004, 8
      %s1006 = scalar_lea.vmem %s11, %s1005
      %s1007 = smul.u32 4, %s24
      %p1008 = scmp.lt.s32.totalorder %s1007, 7
      %s1009 = scalar_select %p1008, %s1007, 7
      %s1010 = smul.addr %s1009, 8
      %s1011 = scalar_lea.vmem %s12, %s1010
      // Predicated region
      $region65: #{tpu_custom_call.1} parent=63 // pred_check
        %p1012 = pneg %p278
      $region66: #{tpu_custom_call.1} parent=63 // pred_check_branch
        %1014 = sbr.rel (%p1012) target = $region68
      $region67: #{tpu_custom_call.1} parent=63 // pred_region
        %s1015 = smul.u32 4, %s24
      $region68: #{tpu_custom_call.1} parent=63 // pred_fallthru
        _
      // Predicated region
      $region69: #{tpu_custom_call.1} parent=63 // pred_check
        %p1016 = pneg %p304
      $region70: #{tpu_custom_call.1} parent=63 // pred_check_branch
        %1018 = sbr.rel (%p1016) target = $region72
      $region71: #{tpu_custom_call.1} parent=63 // pred_region
        %s1019 = smul.u32 4, %s24
      $region72: #{tpu_custom_call.1} parent=63 // pred_fallthru
        _
    $region64: #{tpu_custom_call.1} parent=5 // pred_fallthru
      _
    %p1020 = scmp.le.s32.totalorder 2, %s19
    // Predicated region
    $region73: #{tpu_custom_call.1} parent=5 // pred_check
      %p1021 = pneg %p1020
    $region74: #{tpu_custom_call.1} parent=5 // pred_check_branch
      %1023 = sbr.rel (%p1021) target = $region76
    $region75: #{tpu_custom_call.1} parent=5 // pred_region
      %s1024 = ssub.s32 %s19, 2
      // Predicated region
      $region77: #{tpu_custom_call.1} parent=75 // pred_check
        %p1025 = pneg %p284
      $region78: #{tpu_custom_call.1} parent=75 // pred_check_branch
        %1027 = sbr.rel (%p1025) target = $region80
      $region79: #{tpu_custom_call.1} parent=75 // pred_region
        %s1028 = smul.u32 4, %s25
        %p1029 = scmp.lt.s32.totalorder %s1028, 7
        %s1030 = scalar_select %p1029, %s1028, 7
        %s1031 = smul.addr %s1030, 8
        %s1032 = scalar_lea.vmem %s11, %s1031
      $region80: #{tpu_custom_call.1} parent=75 // pred_fallthru
        _
      // Predicated region
      $region81: #{tpu_custom_call.1} parent=75 // pred_check
        %p1033 = pneg %p310
      $region82: #{tpu_custom_call.1} parent=75 // pred_check_branch
        %1035 = sbr.rel (%p1033) target = $region84
      $region83: #{tpu_custom_call.1} parent=75 // pred_region
        %s1036 = smul.u32 4, %s25
        %p1037 = scmp.lt.s32.totalorder %s1036, 7
        %s1038 = scalar_select %p1037, %s1036, 7
        %s1039 = smul.addr %s1038, 8
        %s1040 = scalar_lea.vmem %s12, %s1039
      $region84: #{tpu_custom_call.1} parent=75 // pred_fallthru
        _
    $region76: #{tpu_custom_call.1} parent=5 // pred_fallthru
      _
  $region6: #{tpu_custom_call.1} parent=0 // loop_footer
    %s23 = sadd.s32 1, %s19
  $region7: #{tpu_custom_call.1} parent=0 // loop_footer_branch
    %18 = sbr.rel target = $region3
  $region8: #{tpu_custom_call.1} parent=0 // loop_exit
    _

</llo_original>
